<compile_context>
chip_gen: v5e
topology: v5e:2x2
jax: 0.10.0
libtpu: 0.0.40
codegen_flags: <defaults>
</compile_context>

<pallas_src>
import functools

import jax
import jax.numpy as jnp
from jax.experimental import pallas as pl
from jax.experimental.pallas import tpu as pltpu

BN_EPS = 1e-5


def _round_up(x, m):
    return (x + m - 1) // m * m


# ---------------------------------------------------------------------------
# Kernels
# ---------------------------------------------------------------------------
def _mlp_tail(h_pre, w2_ref, b2_ref, w3_ref, b3_ref, w4_ref, b4_ref, o_ref):
    """Layers 2..4 + sigmoid on an f32 (tile_n, h1) pre-activation; lane-dense store."""
    cd = w2_ref.dtype                                   # MXU input dtype (bf16 or f32)
    h = jnp.maximum(h_pre, 0.0)                                              # ReLU 1
    h = jnp.dot(h.astype(cd), w2_ref[...], preferred_element_type=jnp.float32) + b2_ref[...]
    h = jnp.maximum(h, 0.0)                                                  # ReLU 2
    h = jnp.dot(h.astype(cd), w3_ref[...], preferred_element_type=jnp.float32) + b3_ref[...]
    h = jnp.maximum(h, 0.0)                                                  # ReLU 3
    # Head: (1, h3) x (tile_n, h3)^T -> (1, tile_n): lane-dense logits row.
    logits = jax.lax.dot_general(
        w4_ref[...], h.astype(cd),
        (((1,), (1,)), ((), ())),
        preferred_element_type=jnp.float32) + b4_ref[...]
    probs = jax.nn.sigmoid(logits)                       # (1, tile_n)
    # Broadcast to 8 sublanes -> fully aligned (8, tile_n) store / writeback.
    o_ref[...] = jnp.broadcast_to(probs, o_ref.shape)


def vasya_mlp_kernel_fused(x_ref, w1_ref, b1_ref, w2_ref, b2_ref, w3_ref, b3_ref,
                           w4_ref, b4_ref, o_ref):
    """Single K step: whole d_in resident; no accumulator round-trip."""
    h = jnp.dot(x_ref[...], w1_ref[...], preferred_element_type=jnp.float32) + b1_ref[...]
    _mlp_tail(h, w2_ref, b2_ref, w3_ref, b3_ref, w4_ref, b4_ref, o_ref)


def vasya_mlp_kernel_ksplit(x_ref, w1_ref, b1_ref, w2_ref, b2_ref, w3_ref, b3_ref,
                            w4_ref, b4_ref, o_ref, acc_ref):
    """d_in split across grid axis 1: accumulate x @ w1 in f32, finalize on last k."""
    k = pl.program_id(1)

    @pl.when(k == 0)
    def _():
        acc_ref[...] = jnp.zeros_like(acc_ref)

    acc_ref[...] += jnp.dot(x_ref[...], w1_ref[...], preferred_element_type=jnp.float32)

    @pl.when(k == pl.num_programs(1) - 1)
    def _():
        _mlp_tail(acc_ref[...] + b1_ref[...],
                  w2_ref, b2_ref, w3_ref, b3_ref, w4_ref, b4_ref, o_ref)


# ---------------------------------------------------------------------------
# Parameters (PyTorch-default-style init) and BN folding
# ---------------------------------------------------------------------------
def init_params(key, input_dim, hidden_dim):
    """Linear: U(-1/sqrt(fan_in), 1/sqrt(fan_in)); BN: gamma=1, beta=0, mean=0, var=1."""
    dims = [input_dim, hidden_dim, hidden_dim // 2, hidden_dim // 4, 1]
    params = []
    for i in range(4):
        fan_in, fan_out = dims[i], dims[i + 1]
        key, kw, kb = jax.random.split(key, 3)
        bound = 1.0 / jnp.sqrt(jnp.float32(fan_in))
        w = jax.random.uniform(kw, (fan_in, fan_out), jnp.float32, -bound, bound)
        b = jax.random.uniform(kb, (1, fan_out), jnp.float32, -bound, bound)
        layer = {"w": w, "b": b}
        if i < 3:  # first three Linears are followed by BatchNorm1d
            layer["gamma"] = jnp.ones((1, fan_out), jnp.float32)
            layer["beta"] = jnp.zeros((1, fan_out), jnp.float32)
            layer["mean"] = jnp.zeros((1, fan_out), jnp.float32)
            layer["var"] = jnp.ones((1, fan_out), jnp.float32)
        params.append(layer)
    return params


def _fold_params(params, compute_dtype):
    """Fold inference BatchNorm into the preceding Linear; cast MXU weights."""
    folded = []
    for i, p in enumerate(params):
        w, b = p["w"], p["b"]
        if i < 3:
            scale = p["gamma"] * jax.lax.rsqrt(p["var"] + BN_EPS)    # (1, out)
            w = w * scale
            b = (b - p["mean"]) * scale + p["beta"]
        folded.append((w, b))
    (w1, b1), (w2, b2), (w3, b3), (w4, b4) = folded
    w1 = w1.astype(compute_dtype)
    w2 = w2.astype(compute_dtype)
    w3 = w3.astype(compute_dtype)
    w4 = w4.reshape(1, -1).astype(compute_dtype)    # (1, h3) row for the transposed head dot
    b4 = b4.reshape(1, 1)
    return w1, b1, w2, b2, w3, b3, w4, b4           # biases stay f32


# ---------------------------------------------------------------------------
# VMEM budget and tiling
# ---------------------------------------------------------------------------
def _vmem_capacity_bytes():
    """Per-core VMEM capacity; conservative (v7x-safe) fallback if the query fails."""
    try:
        info = pltpu.get_tpu_info()
        for attr in ("vmem_capacity_bytes", "vmem_size_bytes", "vmem_bytes"):
            cap = getattr(info, attr, None)
            if cap:
                return int(cap)
    except Exception:
        pass
    return 64 * 2**20


def _derive_tiling(n, d_in, h1, h2, h3, x_itemsize, w_itemsize, budget):
    """Pick (tile_n, tile_k, d_in_padded, num_k) from the VMEM budget."""
    avail = int(budget * 0.85)                      # headroom for compiler scratch
    row_align = 16 if x_itemsize < 4 else 8         # bf16 sublane packing

    # Tail weights/biases are always resident (single-buffered).
    tail_resident = (h1 * h2 + h2 * h3 + h3) * w_itemsize + (h1 + h2 + h3 + 1) * 4
    # Per batch row: f32 h1 acc + live h1/h2/h3 activations + double-buffered out rows.
    per_row_tail = (2 * h1 + h2 + h3) * 4 + 2 * 8 * 4

    # Case A: whole d_in resident (w1 single-buffered, x tile double-buffered).
    resident_a = tail_resident + d_in * h1 * w_itemsize
    per_row_a = 2 * d_in * x_itemsize + per_row_tail
    rows_a = max(0, avail - resident_a) // per_row_a

    small_tile = _round_up(max(n, 1), row_align)
    if rows_a >= min(small_tile, 1024):
        if n <= rows_a:
            if n < 512:
                tile_n = small_tile                                  # one small tile
            else:
                tile_n = min(1024, _round_up(-(-n // 2), 128))       # >=2 tiles (megacore)
        else:
            tile_n = max(128, min(1024, rows_a // 128 * 128))        # budget-limited
        return tile_n, d_in, d_in, 1

    # Case B: K-split over d_in; keep the MXU M dim full instead of shrinking tile_n.
    tile_n = min(256, _round_up(max(n, 1), 128))
    free = avail - tail_resident - tile_n * per_row_tail
    denom = 2 * tile_n * x_itemsize + 2 * h1 * w_itemsize            # per d_in column
    tile_k = max(128, (free // denom) // 128 * 128) if free > 0 else 128
    d_in_p = _round_up(d_in, tile_k)
    return tile_n, tile_k, d_in_p, d_in_p // tile_k


# ---------------------------------------------------------------------------
# Wrapper
# ---------------------------------------------------------------------------
@functools.partial(jax.jit, static_argnames=("compute_dtype", "vmem_budget_bytes"))
def vasya_classifier_forward(x, params, compute_dtype=jnp.bfloat16, vmem_budget_bytes=None):
    """x: (N, D1, D2) -> probabilities (N, 1) float32."""
    n = x.shape[0]
    x_flat = x.reshape(n, -1)                         # nn.Flatten()
    d_in = x_flat.shape[1]

    w1, b1, w2, b2, w3, b3, w4, b4 = _fold_params(params, compute_dtype)
    h1, h2, h3 = w1.shape[1], w2.shape[1], w3.shape[1]

    # Stream x in the MXU compute dtype (halves the dominant HBM stream for bf16).
    # Ideally the caller already provides bf16 so this cast fuses upstream.
    if x_flat.dtype != compute_dtype:
        x_flat = x_flat.astype(compute_dtype)
    x_itemsize = jnp.dtype(compute_dtype).itemsize

    capacity = _vmem_capacity_bytes()
    if vmem_budget_bytes is None:
        budget = min(int(capacity * 0.75), 100 * 2**20)   # ~48 MiB v7x, ~96 MiB v5e/v6e
    else:
        budget = int(vmem_budget_bytes)
    vmem_limit = int(min(int(capacity * 0.9), max(budget, 32 * 2**20)))

    tile_n, tile_k, d_in_p, num_k = _derive_tiling(
        n, d_in, h1, h2, h3, x_itemsize, x_itemsize, budget)

    padded_n = _round_up(n, tile_n)
    if padded_n != n or d_in_p != d_in:
        x_flat = jnp.pad(x_flat, ((0, padded_n - n), (0, d_in_p - d_in)))
    if d_in_p != d_in:
        w1 = jnp.pad(w1, ((0, d_in_p - d_in), (0, 0)))   # zero rows -> zero contribution
    num_n = padded_n // tile_n
    grid = (num_n, num_k)

    def resident(a):  # constant-index operands: single-buffered, stay in VMEM
        return pl.BlockSpec(a.shape, lambda i, k: (0, 0), pipeline_mode=pl.Buffered(1))

    if num_k == 1:
        w1_spec = pl.BlockSpec((tile_k, h1), lambda i, k: (0, 0),
                               pipeline_mode=pl.Buffered(1))
        kernel = vasya_mlp_kernel_fused
        scratch = []
    else:
        w1_spec = pl.BlockSpec((tile_k, h1), lambda i, k: (k, 0))   # streamed over K
        kernel = vasya_mlp_kernel_ksplit
        scratch = [pltpu.VMEM((tile_n, h1), jnp.float32)]

    in_specs = [
        pl.BlockSpec((tile_n, tile_k), lambda i, k: (i, k)),        # x (streamed)
        w1_spec,
        resident(b1), resident(w2), resident(b2),
        resident(w3), resident(b3), resident(w4), resident(b4),
    ]
    # Lane-dense output: (8, tile_n) aligned block per batch tile.
    out_spec = pl.BlockSpec((8, tile_n), lambda i, k: (0, i))

    flops = 2 * padded_n * (d_in_p * h1 + h1 * h2 + h2 * h3 + h3)
    weight_bytes = sum(int(a.size) * a.dtype.itemsize
                       for a in (w1, b1, w2, b2, w3, b3, w4, b4))
    bytes_accessed = padded_n * d_in_p * x_itemsize + weight_bytes + 8 * padded_n * 4

    out = pl.pallas_call(
        kernel,
        out_shape=jax.ShapeDtypeStruct((8, padded_n), jnp.float32),
        grid=grid,
        in_specs=in_specs,
        out_specs=out_spec,
        scratch_shapes=scratch,
        compiler_params=pltpu.CompilerParams(
            dimension_semantics=("parallel", "arbitrary"),
            vmem_limit_bytes=vmem_limit,
        ),
        cost_estimate=pl.CostEstimate(
            flops=flops, transcendentals=padded_n, bytes_accessed=bytes_accessed),
    )(x_flat, w1, b1, w2, b2, w3, b3, w4, b4)

    return out[0, :n].reshape(n, 1)


# ---------------------------------------------------------------------------
# Pure-JAX reference (PyTorch eval-mode forward)
# ---------------------------------------------------------------------------
def reference_forward(x, params):
    h = x.reshape(x.shape[0], -1)
    for i, p in enumerate(params):
        h = h @ p["w"] + p["b"]
        if i < 3:
            h = (h - p["mean"]) * jax.lax.rsqrt(p["var"] + BN_EPS) * p["gamma"] + p["beta"]
            h = jnp.maximum(h, 0.0)
    return jax.nn.sigmoid(h)


if __name__ == "__main__":
    key = jax.random.PRNGKey(0)
    k_x, k_p, k_x2, k_p2 = jax.random.split(key, 4)

    # X is (N, D1, D2) in the original script -> input_dim = D1 * D2.
    batch, d1, d2 = 2, 4, 16
    hidden_dim = 32                     # small stand-in for the default 256
    x = jax.random.normal(k_x, (batch, d1, d2), jnp.float32)
    params = init_params(k_p, d1 * d2, hidden_dim)
    ref = reference_forward(x, params)

    # f32 compute path: must match the PyTorch-style reference tightly.
    out_f32 = jax.block_until_ready(
        vasya_classifier_forward(x, params, compute_dtype=jnp.float32))
    assert out_f32.shape == (batch, 1)
    assert jnp.allclose(out_f32, ref, atol=1e-5, rtol=1e-5), (out_f32, ref)

    # bf16 MXU / bf16-x-streaming path (production default): small deviation allowed.
    out_bf16 = jax.block_until_ready(
        vasya_classifier_forward(x, params, compute_dtype=jnp.bfloat16))
    assert out_bf16.shape == (batch, 1)
    assert jnp.allclose(out_bf16, ref, atol=2e-2, rtol=2e-2), (out_bf16, ref)

    # Exercise the d_in K-split path: tiny budget forces tile_k=128 over d_in=320.
    batch2, d1b, d2b = 4, 4, 80
    x2 = jax.random.normal(k_x2, (batch2, d1b, d2b), jnp.float32)
    params2 = init_params(k_p2, d1b * d2b, hidden_dim)
    ref2 = reference_forward(x2, params2)
    out_ks = jax.block_until_ready(
        vasya_classifier_forward(x2, params2, compute_dtype=jnp.float32,
                                 vmem_budget_bytes=64 * 1024))
    assert out_ks.shape == (batch2, 1)
    assert jnp.allclose(out_ks, ref2, atol=1e-5, rtol=1e-5), (out_ks, ref2)

    print("KERNEL_OK")
</pallas_src>

<mosaic_0001>
module attributes {stable_mosaic.version = 11 : i64} {
  func.func @vasya_mlp_kernel_fused(%arg0: i32, %arg1: i32, %arg2: memref<8x64xf32, #tpu.memory_space<vmem>>, %arg3: memref<64x32xf32, #tpu.memory_space<vmem>>, %arg4: memref<1x32xf32, #tpu.memory_space<vmem>>, %arg5: memref<32x16xf32, #tpu.memory_space<vmem>>, %arg6: memref<1x16xf32, #tpu.memory_space<vmem>>, %arg7: memref<16x8xf32, #tpu.memory_space<vmem>>, %arg8: memref<1x8xf32, #tpu.memory_space<vmem>>, %arg9: memref<1x8xf32, #tpu.memory_space<vmem>>, %arg10: memref<1x1xf32, #tpu.memory_space<vmem>>, %arg11: memref<8x8xf32, #tpu.memory_space<vmem>>) attributes {dimension_semantics = [#tpu.dimension_semantics<parallel>, #tpu.dimension_semantics<arbitrary>], iteration_bounds = array<i64: 1, 1>, scalar_prefetch = 0 : i64, scratch_operands = 0 : i64, tpu.core_type = #tpu.core_type<tc>, window_params = [{transform_indices = @transform_0, window_bounds = array<i64: 8, 64>}, {pipeline_mode = #tpu.pipeline_mode<synchronous>, transform_indices = @transform_1, window_bounds = array<i64: 64, 32>}, {pipeline_mode = #tpu.pipeline_mode<synchronous>, transform_indices = @transform_2, window_bounds = array<i64: 1, 32>}, {pipeline_mode = #tpu.pipeline_mode<synchronous>, transform_indices = @transform_3, window_bounds = array<i64: 32, 16>}, {pipeline_mode = #tpu.pipeline_mode<synchronous>, transform_indices = @transform_4, window_bounds = array<i64: 1, 16>}, {pipeline_mode = #tpu.pipeline_mode<synchronous>, transform_indices = @transform_5, window_bounds = array<i64: 16, 8>}, {pipeline_mode = #tpu.pipeline_mode<synchronous>, transform_indices = @transform_6, window_bounds = array<i64: 1, 8>}, {pipeline_mode = #tpu.pipeline_mode<synchronous>, transform_indices = @transform_7, window_bounds = array<i64: 1, 8>}, {pipeline_mode = #tpu.pipeline_mode<synchronous>, transform_indices = @transform_8, window_bounds = array<i64: 1, 1>}, {transform_indices = @transform_9, window_bounds = array<i64: 8, 8>}]} {
    %c0 = arith.constant 0 : index
    %c0_0 = arith.constant 0 : index
    %0 = vector.load %arg2[%c0, %c0_0] : memref<8x64xf32, #tpu.memory_space<vmem>>, vector<8x64xf32>
    %c0_1 = arith.constant 0 : index
    %c0_2 = arith.constant 0 : index
    %1 = vector.load %arg3[%c0_1, %c0_2] : memref<64x32xf32, #tpu.memory_space<vmem>>, vector<64x32xf32>
    %cst = arith.constant dense<0.000000e+00> : vector<8x32xf32>
    %2 = tpu.matmul %0, %1, %cst {dimension_numbers = #tpu.dot_dimension_numbers<[1], [0], [0], [1], [0, 0, 1, 1], [], []>} : vector<8x64xf32>, vector<64x32xf32>, vector<8x32xf32> -> vector<8x32xf32>
    %c0_3 = arith.constant 0 : index
    %c0_4 = arith.constant 0 : index
    %3 = vector.load %arg4[%c0_3, %c0_4] : memref<1x32xf32, #tpu.memory_space<vmem>>, vector<1x32xf32>
    %4 = vector.broadcast %3 : vector<1x32xf32> to vector<8x32xf32>
    %5 = arith.addf %2, %4 : vector<8x32xf32>
    %cst_5 = arith.constant 0.000000e+00 : f32
    %6 = vector.broadcast %cst_5 : f32 to vector<8x32xf32>
    %7 = arith.maximumf %5, %6 : vector<8x32xf32>
    %c0_6 = arith.constant 0 : index
    %c0_7 = arith.constant 0 : index
    %8 = vector.load %arg5[%c0_6, %c0_7] : memref<32x16xf32, #tpu.memory_space<vmem>>, vector<32x16xf32>
    %cst_8 = arith.constant dense<0.000000e+00> : vector<8x16xf32>
    %9 = tpu.matmul %7, %8, %cst_8 {dimension_numbers = #tpu.dot_dimension_numbers<[1], [0], [0], [1], [0, 0, 1, 1], [], []>} : vector<8x32xf32>, vector<32x16xf32>, vector<8x16xf32> -> vector<8x16xf32>
    %c0_9 = arith.constant 0 : index
    %c0_10 = arith.constant 0 : index
    %10 = vector.load %arg6[%c0_9, %c0_10] : memref<1x16xf32, #tpu.memory_space<vmem>>, vector<1x16xf32>
    %11 = vector.broadcast %10 : vector<1x16xf32> to vector<8x16xf32>
    %12 = arith.addf %9, %11 : vector<8x16xf32>
    %cst_11 = arith.constant 0.000000e+00 : f32
    %13 = vector.broadcast %cst_11 : f32 to vector<8x16xf32>
    %14 = arith.maximumf %12, %13 : vector<8x16xf32>
    %c0_12 = arith.constant 0 : index
    %c0_13 = arith.constant 0 : index
    %15 = vector.load %arg7[%c0_12, %c0_13] : memref<16x8xf32, #tpu.memory_space<vmem>>, vector<16x8xf32>
    %cst_14 = arith.constant dense<0.000000e+00> : vector<8x8xf32>
    %16 = tpu.matmul %14, %15, %cst_14 {dimension_numbers = #tpu.dot_dimension_numbers<[1], [0], [0], [1], [0, 0, 1, 1], [], []>} : vector<8x16xf32>, vector<16x8xf32>, vector<8x8xf32> -> vector<8x8xf32>
    %c0_15 = arith.constant 0 : index
    %c0_16 = arith.constant 0 : index
    %17 = vector.load %arg8[%c0_15, %c0_16] : memref<1x8xf32, #tpu.memory_space<vmem>>, vector<1x8xf32>
    %18 = vector.broadcast %17 : vector<1x8xf32> to vector<8x8xf32>
    %19 = arith.addf %16, %18 : vector<8x8xf32>
    %cst_17 = arith.constant 0.000000e+00 : f32
    %20 = vector.broadcast %cst_17 : f32 to vector<8x8xf32>
    %21 = arith.maximumf %19, %20 : vector<8x8xf32>
    %c0_18 = arith.constant 0 : index
    %c0_19 = arith.constant 0 : index
    %22 = vector.load %arg9[%c0_18, %c0_19] : memref<1x8xf32, #tpu.memory_space<vmem>>, vector<1x8xf32>
    %cst_20 = arith.constant dense<0.000000e+00> : vector<1x8xf32>
    %23 = tpu.matmul %22, %21, %cst_20 {dimension_numbers = #tpu.dot_dimension_numbers<[1], [1], [0], [0], [0, 0, 1, 0], [], []>} : vector<1x8xf32>, vector<8x8xf32>, vector<1x8xf32> -> vector<1x8xf32>
    %c0_21 = arith.constant 0 : index
    %c0_22 = arith.constant 0 : index
    %24 = vector.load %arg10[%c0_21, %c0_22] : memref<1x1xf32, #tpu.memory_space<vmem>>, vector<1x1xf32>
    %25 = vector.broadcast %24 : vector<1x1xf32> to vector<1x8xf32>
    %26 = arith.addf %23, %25 : vector<1x8xf32>
    %27 = arith.negf %26 : vector<1x8xf32>
    %28 = math.exp %27 : vector<1x8xf32>
    %cst_23 = arith.constant 1.000000e+00 : f32
    %29 = vector.broadcast %cst_23 : f32 to vector<1x8xf32>
    %30 = arith.addf %29, %28 : vector<1x8xf32>
    %31 = arith.divf %29, %30 : vector<1x8xf32>
    %32 = vector.shape_cast %31 : vector<1x8xf32> to vector<1x8xf32>
    %33 = vector.broadcast %32 : vector<1x8xf32> to vector<8x8xf32>
    %c0_24 = arith.constant 0 : index
    %c0_25 = arith.constant 0 : index
    %34 = vector.load %arg11[%c0_24, %c0_25] : memref<8x8xf32, #tpu.memory_space<vmem>>, vector<8x8xf32>
    tpu.vector_store %arg11[%c0_24, %c0_25], %33 {strides = array<i32>} : memref<8x8xf32, #tpu.memory_space<vmem>>, vector<8x8xf32>,
    return
  }
  func.func @transform_0(%arg0: i32, %arg1: i32) -> (i32, i32) {
    %c0_i32 = arith.constant 0 : i32
    return %arg0, %arg1 : i32, i32
  }
  func.func @transform_1(%arg0: i32, %arg1: i32) -> (i32, i32) {
    %c0_i32 = arith.constant 0 : i32
    %c0_i32_0 = arith.constant 0 : i32
    %c0_i32_1 = arith.constant 0 : i32
    return %c0_i32, %c0_i32_0 : i32, i32
  }
  func.func @transform_2(%arg0: i32, %arg1: i32) -> (i32, i32) {
    %c0_i32 = arith.constant 0 : i32
    %c0_i32_0 = arith.constant 0 : i32
    %c0_i32_1 = arith.constant 0 : i32
    return %c0_i32, %c0_i32_0 : i32, i32
  }
  func.func @transform_3(%arg0: i32, %arg1: i32) -> (i32, i32) {
    %c0_i32 = arith.constant 0 : i32
    %c0_i32_0 = arith.constant 0 : i32
    %c0_i32_1 = arith.constant 0 : i32
    return %c0_i32, %c0_i32_0 : i32, i32
  }
  func.func @transform_4(%arg0: i32, %arg1: i32) -> (i32, i32) {
    %c0_i32 = arith.constant 0 : i32
    %c0_i32_0 = arith.constant 0 : i32
    %c0_i32_1 = arith.constant 0 : i32
    return %c0_i32, %c0_i32_0 : i32, i32
  }
  func.func @transform_5(%arg0: i32, %arg1: i32) -> (i32, i32) {
    %c0_i32 = arith.constant 0 : i32
    %c0_i32_0 = arith.constant 0 : i32
    %c0_i32_1 = arith.constant 0 : i32
    return %c0_i32, %c0_i32_0 : i32, i32
  }
  func.func @transform_6(%arg0: i32, %arg1: i32) -> (i32, i32) {
    %c0_i32 = arith.constant 0 : i32
    %c0_i32_0 = arith.constant 0 : i32
    %c0_i32_1 = arith.constant 0 : i32
    return %c0_i32, %c0_i32_0 : i32, i32
  }
  func.func @transform_7(%arg0: i32, %arg1: i32) -> (i32, i32) {
    %c0_i32 = arith.constant 0 : i32
    %c0_i32_0 = arith.constant 0 : i32
    %c0_i32_1 = arith.constant 0 : i32
    return %c0_i32, %c0_i32_0 : i32, i32
  }
  func.func @transform_8(%arg0: i32, %arg1: i32) -> (i32, i32) {
    %c0_i32 = arith.constant 0 : i32
    %c0_i32_0 = arith.constant 0 : i32
    %c0_i32_1 = arith.constant 0 : i32
    return %c0_i32, %c0_i32_0 : i32, i32
  }
  func.func @transform_9(%arg0: i32, %arg1: i32) -> (i32, i32) {
    %c0_i32 = arith.constant 0 : i32
    %c0_i32_0 = arith.constant 0 : i32
    return %c0_i32, %arg0 : i32, i32
  }
}

</mosaic_0001>

<llo_original>
// kernel: vasya_classifier_forward.1
$region0: #{vasya_classifier_forward.1}
  #allocation0 [shape = 'u32[]', space=smem, size = 0x4, offset = 0x4, fixed_abs, tag = 'smem constant byte address 0x4 - core index']
  #allocation1 [shape = 'u32[72,128]{1,0:T(1,128)}', space=vmem, size = 0x9000, scoped, tag = 'internal scratch']
  #allocation2 [shape = 'f32[1,1]{1,0:T(1,128)S(1)}', space=vmem, size = 0x200, scoped, tag = 'scoped memory for vasya_classifier_forward.1']
  %s0 = inlined_call_operand.vmem [shape: f32[8,64], index: 0, kind: input, shape index: {}]
  %s1 = inlined_call_operand.vmem [shape: f32[64,32], index: 1, kind: input, shape index: {}]
  %s2 = inlined_call_operand.vmem [shape: f32[1,32], index: 2, kind: input, shape index: {}]
  %s3 = inlined_call_operand.vmem [shape: f32[32,16], index: 3, kind: input, shape index: {}]
  %s4 = inlined_call_operand.vmem [shape: f32[1,16], index: 4, kind: input, shape index: {}]
  %s5 = inlined_call_operand.vmem [shape: f32[16,8], index: 5, kind: input, shape index: {}]
  %s6 = inlined_call_operand.vmem [shape: f32[1,8], index: 6, kind: input, shape index: {}]
  %s7 = inlined_call_operand.vmem [shape: f32[1,8], index: 7, kind: input, shape index: {}]
  %s8 = inlined_call_operand.<no memory space> [shape: f32[1,1], index: 8, kind: input, shape index: {}]
  %s9 = inlined_call_operand.vmem [shape: f32[8,8], index: 9, kind: output, shape index: {}]
  %s10 = sld [smem:[#allocation0]]
  $region46: #{vasya_classifier_forward.1} parent=0
    _
  %s12 = ssub.s32 1, %s10
  %s13 = scalar_select 0, %s12, %s10
  %v14 = vstv %s8
  %15 = vst [vmem:[#allocation2] sm:$0x1] %v14
  // Predicated region
  $region2: #{vasya_classifier_forward.1} parent=0 // pred_check
    _
  $region3: #{vasya_classifier_forward.1} parent=0 // pred_check_branch
    %17 = sbr.rel (0) target = $region5
  $region4: #{vasya_classifier_forward.1} parent=0 // pred_region
    _
  $region5: #{vasya_classifier_forward.1} parent=0 // pred_fallthru
    _
  // Predicated region
  $region6: #{vasya_classifier_forward.1} parent=0 // pred_check
    _
  $region7: #{vasya_classifier_forward.1} parent=0 // pred_check_branch
    %19 = sbr.rel (0) target = $region9
  $region8: #{vasya_classifier_forward.1} parent=0 // pred_region
    _
  $region9: #{vasya_classifier_forward.1} parent=0 // pred_fallthru
    _
  // Predicated region
  $region10: #{vasya_classifier_forward.1} parent=0 // pred_check
    _
  $region11: #{vasya_classifier_forward.1} parent=0 // pred_check_branch
    %21 = sbr.rel (0) target = $region13
  $region12: #{vasya_classifier_forward.1} parent=0 // pred_region
    _
  $region13: #{vasya_classifier_forward.1} parent=0 // pred_fallthru
    _
  // Predicated region
  $region14: #{vasya_classifier_forward.1} parent=0 // pred_check
    _
  $region15: #{vasya_classifier_forward.1} parent=0 // pred_check_branch
    %23 = sbr.rel (0) target = $region17
  $region16: #{vasya_classifier_forward.1} parent=0 // pred_region
    _
  $region17: #{vasya_classifier_forward.1} parent=0 // pred_fallthru
    _
  // Predicated region
  $region18: #{vasya_classifier_forward.1} parent=0 // pred_check
    _
  $region19: #{vasya_classifier_forward.1} parent=0 // pred_check_branch
    %25 = sbr.rel (0) target = $region21
  $region20: #{vasya_classifier_forward.1} parent=0 // pred_region
    _
  $region21: #{vasya_classifier_forward.1} parent=0 // pred_fallthru
    _
  // Predicated region
  $region22: #{vasya_classifier_forward.1} parent=0 // pred_check
    _
  $region23: #{vasya_classifier_forward.1} parent=0 // pred_check_branch
    %27 = sbr.rel (0) target = $region25
  $region24: #{vasya_classifier_forward.1} parent=0 // pred_region
    _
  $region25: #{vasya_classifier_forward.1} parent=0 // pred_fallthru
    _
  // Predicated region
  $region26: #{vasya_classifier_forward.1} parent=0 // pred_check
    _
  $region27: #{vasya_classifier_forward.1} parent=0 // pred_check_branch
    %29 = sbr.rel (0) target = $region29
  $region28: #{vasya_classifier_forward.1} parent=0 // pred_region
    _
  $region29: #{vasya_classifier_forward.1} parent=0 // pred_fallthru
    _
  // Predicated region
  $region30: #{vasya_classifier_forward.1} parent=0 // pred_check
    _
  $region31: #{vasya_classifier_forward.1} parent=0 // pred_check_branch
    %31 = sbr.rel (0) target = $region33
  $region32: #{vasya_classifier_forward.1} parent=0 // pred_region
    _
  $region33: #{vasya_classifier_forward.1} parent=0 // pred_fallthru
    _
  // Predicated region
  $region34: #{vasya_classifier_forward.1} parent=0 // pred_check
    _
  $region35: #{vasya_classifier_forward.1} parent=0 // pred_check_branch
    %33 = sbr.rel (0) target = $region37
  $region36: #{vasya_classifier_forward.1} parent=0 // pred_region
    _
  $region37: #{vasya_classifier_forward.1} parent=0 // pred_fallthru
    _
  %v34 = vld [vmem:[%s0] sm:$0xff]
  %v35 = vld [vmem:[%s1] sm:$0xff]
  %v36 = vld [vmem:[%s1 + $0x8] sm:$0xff]
  %v37 = vld [vmem:[%s1 + $0x10] sm:$0xff]
  %v38 = vld [vmem:[%s1 + $0x18] sm:$0xff]
  %v39 = vld [vmem:[%s1 + $0x20] sm:$0xff]
  %v40 = vld [vmem:[%s1 + $0x28] sm:$0xff]
  %v41 = vld [vmem:[%s1 + $0x30] sm:$0xff]
  %v42 = vld [vmem:[%s1 + $0x38] sm:$0xff]
  %v43 = vld [vmem:[%s2] sm:$0x1]
  %v45 = vperm.slane %v43, 0
  %vm47 = vcmask 523264
  %v49 = vsel %vm47, %v34, 0
  %51 = vmatpush.msra.mxu0 0.0
  %52 = vmatpush.msra.mxu0 0.0
  %53 = vmatpush.msra.mxu0 0.0
  %54 = vmatpush.msra.mxu0 0.0
  %55 = vmatpush.msra.mxu0 0.0
  %56 = vmatpush.msra.mxu0 0.0
  %57 = vmatpush.msra.mxu0 0.0
  %58 = vmatpush.msra.mxu0 0.0
  %59 = vmatpush.msra.mxu0 %v42
  %60 = vmatpush.msra.mxu0 %v41
  %61 = vmatpush.msra.mxu0 %v40
  %62 = vmatpush.msra.mxu0 %v39
  %63 = vmatpush.msra.mxu0 %v38
  %64 = vmatpush.msra.mxu0 %v37
  %65 = vmatpush.msra.mxu0 %v36
  %66 = vmatpush.msra.mxu0 %v35
  %67 = vmatmul.f32.gmra.mxu0 %v49
  %v68 = vpop.f32.mrf.mxu0
  %v69 = vadd.f32 %v45, %v68
  %70 = vdwg.mxu0
  %v71 = vmax.f32 %v69, 0.0
  %v72 = vld [vmem:[%s3] sm:$0xff]
  %v73 = vld [vmem:[%s3 + $0x8] sm:$0xff]
  %v74 = vld [vmem:[%s3 + $0x10] sm:$0xff]
  %v75 = vld [vmem:[%s3 + $0x18] sm:$0xff]
  %v76 = vld [vmem:[%s4] sm:$0x1]
  %v78 = vperm.slane %v76, 0
  %vm80 = vcmask 261120
  %v82 = vsel %vm80, %v71, 0
  %84 = vmatpush.msra.mxu0 0.0
  %85 = vmatpush.msra.mxu0 0.0
  %86 = vmatpush.msra.mxu0 0.0
  %87 = vmatpush.msra.mxu0 0.0
  %88 = vmatpush.msra.mxu0 0.0
  %89 = vmatpush.msra.mxu0 0.0
  %90 = vmatpush.msra.mxu0 0.0
  %91 = vmatpush.msra.mxu0 0.0
  %92 = vmatpush.msra.mxu0 0.0
  %93 = vmatpush.msra.mxu0 0.0
  %94 = vmatpush.msra.mxu0 0.0
  %95 = vmatpush.msra.mxu0 0.0
  %96 = vmatpush.msra.mxu0 %v75
  %97 = vmatpush.msra.mxu0 %v74
  %98 = vmatpush.msra.mxu0 %v73
  %99 = vmatpush.msra.mxu0 %v72
  %100 = vmatmul.f32.gmra.mxu0 %v82
  %v101 = vpop.f32.mrf.mxu0
  %v102 = vadd.f32 %v78, %v101
  %103 = vdwg.mxu0
  %v104 = vmax.f32 %v102, 0.0
  %v105 = vld [vmem:[%s5] sm:$0xff]
  %v106 = vld [vmem:[%s5 + $0x8] sm:$0xff]
  %v107 = vld [vmem:[%s6] sm:$0x1]
  %v109 = vperm.slane %v107, 0
  %vm111 = vcmask 130048
  %v113 = vsel %vm111, %v104, 0
  %115 = vmatpush.msra.mxu0 0.0
  %116 = vmatpush.msra.mxu0 0.0
  %117 = vmatpush.msra.mxu0 0.0
  %118 = vmatpush.msra.mxu0 0.0
  %119 = vmatpush.msra.mxu0 0.0
  %120 = vmatpush.msra.mxu0 0.0
  %121 = vmatpush.msra.mxu0 0.0
  %122 = vmatpush.msra.mxu0 0.0
  %123 = vmatpush.msra.mxu0 0.0
  %124 = vmatpush.msra.mxu0 0.0
  %125 = vmatpush.msra.mxu0 0.0
  %126 = vmatpush.msra.mxu0 0.0
  %127 = vmatpush.msra.mxu0 0.0
  %128 = vmatpush.msra.mxu0 0.0
  %129 = vmatpush.msra.mxu0 %v106
  %130 = vmatpush.msra.mxu0 %v105
  %131 = vmatmul.f32.gmra.mxu0 %v113
  %v132 = vpop.f32.mrf.mxu0
  %v133 = vadd.f32 %v109, %v132
  %134 = vdwg.mxu0
  %v135 = vmax.f32 %v133, 0.0
  %v136 = vld [vmem:[%s7] sm:$0x1]
  %v137 = vld [vmem:[#allocation2] sm:$0x1]
  %139 = vset.pattern.permute.xlu0 0
  %140 = vperm.xlu0 %139, %v137
  %v141 = vpop.permute.xlu0 %140
  %v143 = vperm.slane %v141, 0
  %vm144 = vcmask 64512
  %v146 = vsel %vm144, %v136, 0
  %v149 = vsel %vm144, %v135, 0
  %151 = vmatpush.xpose.msra.mxu0 0.0
  %152 = vmatpush.xpose.msra.mxu0 0.0
  %153 = vmatpush.xpose.msra.mxu0 0.0
  %154 = vmatpush.xpose.msra.mxu0 0.0
  %155 = vmatpush.xpose.msra.mxu0 0.0
  %156 = vmatpush.xpose.msra.mxu0 0.0
  %157 = vmatpush.xpose.msra.mxu0 0.0
  %158 = vmatpush.xpose.msra.mxu0 0.0
  %159 = vmatpush.xpose.msra.mxu0 0.0
  %160 = vmatpush.xpose.msra.mxu0 0.0
  %161 = vmatpush.xpose.msra.mxu0 0.0
  %162 = vmatpush.xpose.msra.mxu0 0.0
  %163 = vmatpush.xpose.msra.mxu0 0.0
  %164 = vmatpush.xpose.msra.mxu0 0.0
  %165 = vmatpush.xpose.msra.mxu0 0.0
  %166 = vmatpush.xpose.msra.mxu0 %v149
  %167 = vmatmul.f32.gmra.mxu0 %v146
  %v168 = vpop.f32.mrf.mxu0
  %v169 = vadd.f32 %v143, %v168
  %170 = vdwg.mxu0
  %v171 = vxor.u32 %v169, 2147483648
  %v172 = vmul.f32 %v171, 1.442695
  %v173 = vpow.pop %v172
  %v174 = vadd.f32 %v173, 1.0
  %v175 = vrcp.pop %v174
  %v176 = vmul.f32 %v174, %v175
  %v177 = vsub.f32 1.0, %v176
  %v178 = vmul.f32 %v175, %v177
  %v179 = vadd.f32 %v175, %v178
  %vm180 = vweird.f32 %v174
  %vm181 = vweird.f32 %v175
  %vm182 = vmor %vm180, %vm181
  %v183 = vsel %vm182, %v175, %v179
  %v184 = vand.u32 2147483647, %v174
  %vm185 = vcmp.eq.f32.partialorder %v184, 8.507059e+37
  %v186 = vand.u32 %v174, 2147483648
  %v187 = vor.u32 1.1754944e-38, %v186
  %v188 = vsel %vm185, %v187, %v183
  %v189 = vmul.f32 1.0, %v188
  %v190 = vperm.slane %v189, 0
  %191 = vst.msk [vmem:[%s9] sm:$0xff] %vm144, %v190
  // Predicated region
  $region38: #{vasya_classifier_forward.1} parent=0 // pred_check
    _
  $region39: #{vasya_classifier_forward.1} parent=0 // pred_check_branch
    %193 = sbr.rel (0) target = $region41
  $region40: #{vasya_classifier_forward.1} parent=0 // pred_region
    _
  $region41: #{vasya_classifier_forward.1} parent=0 // pred_fallthru
    _
  // Predicated region
  $region42: #{vasya_classifier_forward.1} parent=0 // pred_check
    _
  $region43: #{vasya_classifier_forward.1} parent=0 // pred_check_branch
    %195 = sbr.rel (0) target = $region45
  $region44: #{vasya_classifier_forward.1} parent=0 // pred_region
    _
  $region45: #{vasya_classifier_forward.1} parent=0 // pred_fallthru
    _

</llo_original>
